<compile_context>
chip_gen: v6e
topology: v6e:2x2x1
jax: 0.10.0
libtpu: 0.0.40
codegen_flags: <defaults>
</compile_context>

<pallas_src>
import math
import jax
import jax.numpy as jnp
from jax.experimental import pallas as pl
from jax.experimental.pallas import tpu as pltpu


def _round_up(x, m):
    return ((x + m - 1) // m) * m


def _cdiv(a, b):
    return -(-a // b)


def _choose_tile(B, *, max_tile=16384):
    """Pick (tm, num_tiles) for the batch axis.

    - B <= max_tile: one tile, rounded up to 128 (lane-dense output block);
      pad waste < 128 rows.
    - B >  max_tile: >= 2 roughly-equal 128-aligned tiles, each <= ~max_tile
      (keeps VMEM comfortable on v7x and lets the "parallel" grid axis use
      both v7x TensorCores); pad waste < 128 rows per tile.
    """
    if B <= max_tile:
        return _round_up(B, 128), 1
    nt = max(2, _cdiv(B, max_tile))
    tm = _round_up(_cdiv(B, nt), 128)
    return tm, _cdiv(B, tm)


def vfunction_kernel(x_ref, w1_ref, b1_ref, w2_ref, b2_ref, w3_ref, b3_ref, o_ref):
    # Cast the streaming f32 x tile to bf16 in-kernel; the VPU cast hides under
    # the x DMA, and the wrapper never does a standalone convert pass over HBM.
    x = x_ref[...].astype(jnp.bfloat16)                              # (tm, D)

    # Layer 1: bf16 MXU matmul with f32 accumulation; bias + ReLU on the f32
    # accumulator (v5e-safe, no bf16 VALU needed), then immediately re-cast to
    # bf16 so the big (tm, H) intermediate sits in VMEM at half width.
    w1 = w1_ref[...].astype(jnp.bfloat16)
    h1 = jnp.dot(x, w1, preferred_element_type=jnp.float32)
    h1 = jnp.maximum(h1 + b1_ref[...], 0.0).astype(jnp.bfloat16)     # (tm, H)

    # Layer 2: same recipe.
    w2 = w2_ref[...].astype(jnp.bfloat16)
    h2 = jnp.dot(h1, w2, preferred_element_type=jnp.float32)
    h2 = jnp.maximum(h2 + b2_ref[...], 0.0).astype(jnp.bfloat16)     # (tm, H)

    # Output layer: contract over H against w3 laid out as a (1, H) row so the
    # result lands directly in a lane-dense (1, tm) layout (unmasked stores).
    # Both operands bf16 (halves the implied XLU transpose of h2); f32 accum.
    w3 = w3_ref[...].astype(jnp.bfloat16)
    v = jax.lax.dot_general(
        w3, h2,
        dimension_numbers=(((1,), (1,)), ((), ())),
        preferred_element_type=jnp.float32)                          # (1, tm)
    v = v + b3_ref[...]                                              # (1,1) broadcast
    o_ref[...] = v.reshape(o_ref.shape).astype(o_ref.dtype)          # (1, 1, tm)


def vfunction_forward(o, params, *, max_tile=16384):
    """o: [B, obs_dim] float32. Returns V(o): [B, 1] float32."""
    w1, b1, w2, b2, w3, b3 = params
    B, D = o.shape
    H = w1.shape[1]

    tm, num_tiles = _choose_tile(B, max_tile=max_tile)
    B_pad = num_tiles * tm

    # Feed raw f32 observations; NO bf16 cast here (done in-kernel).
    x = o.astype(jnp.float32)
    if B_pad != B:
        # Only awkward batch sizes hit this; pad waste is < 128 rows per tile
        # by construction, so the extra zero rows are negligible work.
        # TODO(synk): a ragged-tail second pallas_call would avoid this extra
        # HBM copy for very large, awkward B.
        x = jnp.pad(x, ((0, B_pad - B), (0, 0)))

    # Tiny parameter reshapes (a few KiB each); weights stay f32 in HBM and are
    # cast to bf16 inside the kernel.
    w1f = w1.astype(jnp.float32)
    w2f = w2.astype(jnp.float32)
    w3_row = w3.reshape(1, H).astype(jnp.float32)   # (H, 1) -> (1, H)
    b1f = b1.reshape(1, H).astype(jnp.float32)
    b2f = b2.reshape(1, H).astype(jnp.float32)
    b3f = b3.reshape(1, 1).astype(jnp.float32)

    in_specs = [
        pl.BlockSpec((tm, D), lambda i: (i, 0)),      # x tile (batch-tiled stream)
        pl.BlockSpec((D, H), lambda i: (0, 0)),       # W1 (replicated, fetched once)
        pl.BlockSpec((1, H), lambda i: (0, 0)),       # b1
        pl.BlockSpec((H, H), lambda i: (0, 0)),       # W2
        pl.BlockSpec((1, H), lambda i: (0, 0)),       # b2
        pl.BlockSpec((1, H), lambda i: (0, 0)),       # W3 as a row
        pl.BlockSpec((1, 1), lambda i: (0, 0)),       # b3
    ]
    # Lane-dense output slab: [num_tiles, 1, tm]; last dim (tm) maps to lanes.
    out_specs = pl.BlockSpec((1, 1, tm), lambda i: (i, 0, 0))

    out = pl.pallas_call(
        vfunction_kernel,
        out_shape=jax.ShapeDtypeStruct((num_tiles, 1, tm), jnp.float32),
        grid_spec=pltpu.PrefetchScalarGridSpec(
            num_scalar_prefetch=0,
            grid=(num_tiles,),
            in_specs=in_specs,
            out_specs=out_specs,
        ),
        compiler_params=pltpu.CompilerParams(
            dimension_semantics=("parallel",),        # megacore-shardable on v7x
            vmem_limit_bytes=48 * 1024 * 1024,        # ~13 MiB used at tm=16K; headroom
        ),
    )(x, w1f, b1f, w2f, b2f, w3_row, b3f)

    # [num_tiles, 1, tm] -> [B_pad, 1] (row-major preserves batch order) -> [B, 1]
    return out.reshape(B_pad, 1)[:B]


def init_params(key, obs_dim, hidden):
    """Deterministic init mirroring init_weights_:
    xavier_uniform_(weight, gain=1.0), uniform_(bias) in [0, 1)."""
    def xavier(k, fan_in, fan_out):
        limit = math.sqrt(6.0 / (fan_in + fan_out))
        return jax.random.uniform(k, (fan_in, fan_out), jnp.float32, -limit, limit)

    k1, k2, k3, k4, k5, k6 = jax.random.split(key, 6)
    w1 = xavier(k1, obs_dim, hidden)
    b1 = jax.random.uniform(k2, (1, hidden), jnp.float32, 0.0, 1.0)
    w2 = xavier(k3, hidden, hidden)
    b2 = jax.random.uniform(k4, (1, hidden), jnp.float32, 0.0, 1.0)
    w3 = xavier(k5, hidden, 1)
    b3 = jax.random.uniform(k6, (1, 1), jnp.float32, 0.0, 1.0)
    return (w1, b1, w2, b2, w3, b3)


if __name__ == "__main__":
    # Small shapes consistent with the module: batch=8, obs_dim=32, hidden=32.
    key = jax.random.PRNGKey(0)
    k_obs, k_par = jax.random.split(key)

    obs_dim, hidden, batch = 32, 32, 8
    o = jax.random.normal(k_obs, (batch, obs_dim), jnp.float32)
    params = init_params(k_par, obs_dim, hidden)

    v = vfunction_forward(o, params)
    v = jax.block_until_ready(v)
    assert v.shape == (batch, 1)

    w1, b1, w2, b2, w3, b3 = params

    # Reference with the same bf16-operand / f32-accumulate recipe (tight check).
    h1 = jnp.maximum(
        jnp.dot(o.astype(jnp.bfloat16), w1.astype(jnp.bfloat16),
                preferred_element_type=jnp.float32) + b1, 0.0).astype(jnp.bfloat16)
    h2 = jnp.maximum(
        jnp.dot(h1, w2.astype(jnp.bfloat16),
                preferred_element_type=jnp.float32) + b2, 0.0).astype(jnp.bfloat16)
    v_ref = jnp.dot(h2, w3.astype(jnp.bfloat16),
                    preferred_element_type=jnp.float32) + b3
    assert jnp.allclose(v, v_ref, atol=2e-2, rtol=2e-2), float(
        jnp.max(jnp.abs(v - v_ref)))

    # Loose sanity check against the pure-f32 forward pass (PyTorch semantics).
    h1f = jnp.maximum(o @ w1 + b1, 0.0)
    h2f = jnp.maximum(h1f @ w2 + b2, 0.0)
    v_f32 = h2f @ w3 + b3
    assert jnp.allclose(v, v_f32, atol=1e-1, rtol=1e-1), float(
        jnp.max(jnp.abs(v - v_f32)))

    print("KERNEL_OK")
</pallas_src>

<mosaic_0001>
module attributes {stable_mosaic.version = 11 : i64} {
  func.func @vfunction_kernel(%arg0: i32, %arg1: memref<128x32xf32, #tpu.memory_space<vmem>>, %arg2: memref<32x32xf32, #tpu.memory_space<vmem>>, %arg3: memref<1x32xf32, #tpu.memory_space<vmem>>, %arg4: memref<32x32xf32, #tpu.memory_space<vmem>>, %arg5: memref<1x32xf32, #tpu.memory_space<vmem>>, %arg6: memref<1x32xf32, #tpu.memory_space<vmem>>, %arg7: memref<1x1xf32, #tpu.memory_space<vmem>>, %arg8: memref<1x1x128xf32, #tpu.memory_space<vmem>>) attributes {dimension_semantics = [#tpu.dimension_semantics<parallel>], iteration_bounds = array<i64: 1>, scalar_prefetch = 0 : i64, scratch_operands = 0 : i64, tpu.core_type = #tpu.core_type<tc>, window_params = [{transform_indices = @transform_0, window_bounds = array<i64: 128, 32>}, {pipeline_mode = #tpu.pipeline_mode<synchronous>, transform_indices = @transform_1, window_bounds = array<i64: 32, 32>}, {pipeline_mode = #tpu.pipeline_mode<synchronous>, transform_indices = @transform_2, window_bounds = array<i64: 1, 32>}, {pipeline_mode = #tpu.pipeline_mode<synchronous>, transform_indices = @transform_3, window_bounds = array<i64: 32, 32>}, {pipeline_mode = #tpu.pipeline_mode<synchronous>, transform_indices = @transform_4, window_bounds = array<i64: 1, 32>}, {pipeline_mode = #tpu.pipeline_mode<synchronous>, transform_indices = @transform_5, window_bounds = array<i64: 1, 32>}, {pipeline_mode = #tpu.pipeline_mode<synchronous>, transform_indices = @transform_6, window_bounds = array<i64: 1, 1>}, {transform_indices = @transform_7, window_bounds = array<i64: 1, 1, 128>}]} {
    %c0 = arith.constant 0 : index
    %c0_0 = arith.constant 0 : index
    %0 = vector.load %arg1[%c0, %c0_0] : memref<128x32xf32, #tpu.memory_space<vmem>>, vector<128x32xf32>
    %1 = arith.truncf %0 : vector<128x32xf32> to vector<128x32xbf16>
    %c0_1 = arith.constant 0 : index
    %c0_2 = arith.constant 0 : index
    %2 = vector.load %arg2[%c0_1, %c0_2] : memref<32x32xf32, #tpu.memory_space<vmem>>, vector<32x32xf32>
    %3 = arith.truncf %2 : vector<32x32xf32> to vector<32x32xbf16>
    %cst = arith.constant dense<0.000000e+00> : vector<128x32xf32>
    %4 = tpu.matmul %1, %3, %cst {dimension_numbers = #tpu.dot_dimension_numbers<[1], [0], [0], [1], [0, 0, 1, 1], [], []>} : vector<128x32xbf16>, vector<32x32xbf16>, vector<128x32xf32> -> vector<128x32xf32>
    %c0_3 = arith.constant 0 : index
    %c0_4 = arith.constant 0 : index
    %5 = vector.load %arg3[%c0_3, %c0_4] : memref<1x32xf32, #tpu.memory_space<vmem>>, vector<1x32xf32>
    %6 = vector.broadcast %5 : vector<1x32xf32> to vector<128x32xf32>
    %7 = arith.addf %4, %6 : vector<128x32xf32>
    %cst_5 = arith.constant 0.000000e+00 : f32
    %8 = vector.broadcast %cst_5 : f32 to vector<128x32xf32>
    %9 = arith.maximumf %7, %8 : vector<128x32xf32>
    %10 = arith.truncf %9 : vector<128x32xf32> to vector<128x32xbf16>
    %c0_6 = arith.constant 0 : index
    %c0_7 = arith.constant 0 : index
    %11 = vector.load %arg4[%c0_6, %c0_7] : memref<32x32xf32, #tpu.memory_space<vmem>>, vector<32x32xf32>
    %12 = arith.truncf %11 : vector<32x32xf32> to vector<32x32xbf16>
    %cst_8 = arith.constant dense<0.000000e+00> : vector<128x32xf32>
    %13 = tpu.matmul %10, %12, %cst_8 {dimension_numbers = #tpu.dot_dimension_numbers<[1], [0], [0], [1], [0, 0, 1, 1], [], []>} : vector<128x32xbf16>, vector<32x32xbf16>, vector<128x32xf32> -> vector<128x32xf32>
    %c0_9 = arith.constant 0 : index
    %c0_10 = arith.constant 0 : index
    %14 = vector.load %arg5[%c0_9, %c0_10] : memref<1x32xf32, #tpu.memory_space<vmem>>, vector<1x32xf32>
    %15 = vector.broadcast %14 : vector<1x32xf32> to vector<128x32xf32>
    %16 = arith.addf %13, %15 : vector<128x32xf32>
    %cst_11 = arith.constant 0.000000e+00 : f32
    %17 = vector.broadcast %cst_11 : f32 to vector<128x32xf32>
    %18 = arith.maximumf %16, %17 : vector<128x32xf32>
    %19 = arith.truncf %18 : vector<128x32xf32> to vector<128x32xbf16>
    %c0_12 = arith.constant 0 : index
    %c0_13 = arith.constant 0 : index
    %20 = vector.load %arg6[%c0_12, %c0_13] : memref<1x32xf32, #tpu.memory_space<vmem>>, vector<1x32xf32>
    %21 = arith.truncf %20 : vector<1x32xf32> to vector<1x32xbf16>
    %cst_14 = arith.constant dense<0.000000e+00> : vector<1x128xf32>
    %22 = tpu.matmul %21, %19, %cst_14 {dimension_numbers = #tpu.dot_dimension_numbers<[1], [1], [0], [0], [0, 0, 1, 0], [], []>} : vector<1x32xbf16>, vector<128x32xbf16>, vector<1x128xf32> -> vector<1x128xf32>
    %c0_15 = arith.constant 0 : index
    %c0_16 = arith.constant 0 : index
    %23 = vector.load %arg7[%c0_15, %c0_16] : memref<1x1xf32, #tpu.memory_space<vmem>>, vector<1x1xf32>
    %24 = vector.broadcast %23 : vector<1x1xf32> to vector<1x128xf32>
    %25 = arith.addf %22, %24 : vector<1x128xf32>
    %26 = vector.shape_cast %25 : vector<1x128xf32> to vector<1x1x128xf32>
    %c0_17 = arith.constant 0 : index
    %c0_18 = arith.constant 0 : index
    %c0_19 = arith.constant 0 : index
    %27 = vector.load %arg8[%c0_17, %c0_18, %c0_19] : memref<1x1x128xf32, #tpu.memory_space<vmem>>, vector<1x1x128xf32>
    tpu.vector_store %arg8[%c0_17, %c0_18, %c0_19], %26 {strides = array<i32>} : memref<1x1x128xf32, #tpu.memory_space<vmem>>, vector<1x1x128xf32>,
    return
  }
  func.func @transform_0(%arg0: i32) -> (i32, i32) {
    %c0_i32 = arith.constant 0 : i32
    %c0_i32_0 = arith.constant 0 : i32
    return %arg0, %c0_i32 : i32, i32
  }
  func.func @transform_1(%arg0: i32) -> (i32, i32) {
    %c0_i32 = arith.constant 0 : i32
    %c0_i32_0 = arith.constant 0 : i32
    %c0_i32_1 = arith.constant 0 : i32
    return %c0_i32, %c0_i32_0 : i32, i32
  }
  func.func @transform_2(%arg0: i32) -> (i32, i32) {
    %c0_i32 = arith.constant 0 : i32
    %c0_i32_0 = arith.constant 0 : i32
    %c0_i32_1 = arith.constant 0 : i32
    return %c0_i32, %c0_i32_0 : i32, i32
  }
  func.func @transform_3(%arg0: i32) -> (i32, i32) {
    %c0_i32 = arith.constant 0 : i32
    %c0_i32_0 = arith.constant 0 : i32
    %c0_i32_1 = arith.constant 0 : i32
    return %c0_i32, %c0_i32_0 : i32, i32
  }
  func.func @transform_4(%arg0: i32) -> (i32, i32) {
    %c0_i32 = arith.constant 0 : i32
    %c0_i32_0 = arith.constant 0 : i32
    %c0_i32_1 = arith.constant 0 : i32
    return %c0_i32, %c0_i32_0 : i32, i32
  }
  func.func @transform_5(%arg0: i32) -> (i32, i32) {
    %c0_i32 = arith.constant 0 : i32
    %c0_i32_0 = arith.constant 0 : i32
    %c0_i32_1 = arith.constant 0 : i32
    return %c0_i32, %c0_i32_0 : i32, i32
  }
  func.func @transform_6(%arg0: i32) -> (i32, i32) {
    %c0_i32 = arith.constant 0 : i32
    %c0_i32_0 = arith.constant 0 : i32
    %c0_i32_1 = arith.constant 0 : i32
    return %c0_i32, %c0_i32_0 : i32, i32
  }
  func.func @transform_7(%arg0: i32) -> (i32, i32, i32) {
    %c0_i32 = arith.constant 0 : i32
    %c0_i32_0 = arith.constant 0 : i32
    %c0_i32_1 = arith.constant 0 : i32
    return %arg0, %c0_i32, %c0_i32_0 : i32, i32, i32
  }
}

</mosaic_0001>

<llo_original>
// kernel: tpu_custom_call.1
$region0: #{tpu_custom_call.1}
  #allocation0 [shape = 'u32[]', space=smem, size = 0x4, offset = 0x4, fixed_abs, tag = 'smem constant byte address 0x4 - core index']
  #allocation1 [shape = 'u32[144,128]{1,0:T(1,128)}', space=vmem, size = 0x12000, scoped, tag = 'internal scratch']
  #allocation2 [shape = 'f32[1,1]{1,0:T(1,128)S(1)}', space=vmem, size = 0x200, scoped, tag = 'scoped memory for tpu_custom_call.1']
  %s0 = inlined_call_operand.vmem [shape: f32[128,32], index: 0, kind: input, shape index: {}]
  %s1 = inlined_call_operand.vmem [shape: f32[32,32], index: 1, kind: input, shape index: {}]
  %s2 = inlined_call_operand.vmem [shape: f32[1,32], index: 2, kind: input, shape index: {}]
  %s3 = inlined_call_operand.vmem [shape: f32[32,32], index: 3, kind: input, shape index: {}]
  %s4 = inlined_call_operand.vmem [shape: f32[1,32], index: 4, kind: input, shape index: {}]
  %s5 = inlined_call_operand.vmem [shape: f32[1,32], index: 5, kind: input, shape index: {}]
  %s6 = inlined_call_operand.<no memory space> [shape: f32[1,1], index: 6, kind: input, shape index: {}]
  %s7 = inlined_call_operand.hbm [shape: f32[1,1,128], index: 7, kind: output, shape index: {}]
  %s8 = sld [smem:[#allocation0]]
  $region38: #{tpu_custom_call.1} parent=0
    _
  %s10 = ssub.s32 1, %s8
  %s11 = scalar_select 0, %s10, %s8
  %v12 = vstv %s6
  %13 = vst [vmem:[#allocation2] sm:$0x1] %v12
  $region1: #{tpu_custom_call.1} parent=0
    #allocation3 [shape = 'u8[512]{0}', space=vmem, size = 0x400, scoped, tag = 'output window, operand 0, single buffered']
    #allocation4 [shape = 's32[1]{0}', space=sflag, size = 0x4, scoped, tag = 'scoped memory for tpu_custom_call.1']
    %14 = vsyncpa [#allocation4], 0
    // Predicated region
    $region2: #{tpu_custom_call.1} parent=1 // pred_check
      _
    $region3: #{tpu_custom_call.1} parent=1 // pred_check_branch
      %16 = sbr.rel (0) target = $region5
    $region4: #{tpu_custom_call.1} parent=1 // pred_region
      _
    $region5: #{tpu_custom_call.1} parent=1 // pred_fallthru
      _
    // Predicated region
    $region6: #{tpu_custom_call.1} parent=1 // pred_check
      _
    $region7: #{tpu_custom_call.1} parent=1 // pred_check_branch
      %18 = sbr.rel (0) target = $region9
    $region8: #{tpu_custom_call.1} parent=1 // pred_region
      _
    $region9: #{tpu_custom_call.1} parent=1 // pred_fallthru
      _
    // Predicated region
    $region10: #{tpu_custom_call.1} parent=1 // pred_check
      _
    $region11: #{tpu_custom_call.1} parent=1 // pred_check_branch
      %20 = sbr.rel (0) target = $region13
    $region12: #{tpu_custom_call.1} parent=1 // pred_region
      _
    $region13: #{tpu_custom_call.1} parent=1 // pred_fallthru
      _
    // Predicated region
    $region14: #{tpu_custom_call.1} parent=1 // pred_check
      _
    $region15: #{tpu_custom_call.1} parent=1 // pred_check_branch
      %22 = sbr.rel (0) target = $region17
    $region16: #{tpu_custom_call.1} parent=1 // pred_region
      _
    $region17: #{tpu_custom_call.1} parent=1 // pred_fallthru
      _
    // Predicated region
    $region18: #{tpu_custom_call.1} parent=1 // pred_check
      _
    $region19: #{tpu_custom_call.1} parent=1 // pred_check_branch
      %24 = sbr.rel (0) target = $region21
    $region20: #{tpu_custom_call.1} parent=1 // pred_region
      _
    $region21: #{tpu_custom_call.1} parent=1 // pred_fallthru
      _
    // Predicated region
    $region22: #{tpu_custom_call.1} parent=1 // pred_check
      _
    $region23: #{tpu_custom_call.1} parent=1 // pred_check_branch
      %26 = sbr.rel (0) target = $region25
    $region24: #{tpu_custom_call.1} parent=1 // pred_region
      _
    $region25: #{tpu_custom_call.1} parent=1 // pred_fallthru
      _
    // Predicated region
    $region26: #{tpu_custom_call.1} parent=1 // pred_check
      _
    $region27: #{tpu_custom_call.1} parent=1 // pred_check_branch
      %28 = sbr.rel (0) target = $region29
    $region28: #{tpu_custom_call.1} parent=1 // pred_region
      _
    $region29: #{tpu_custom_call.1} parent=1 // pred_fallthru
      _
    %v30 = vld [vmem:[%s0] sm:$0xff]
    %v31 = vld [vmem:[%s0 + $0x8] sm:$0xff]
    %v32 = vld [vmem:[%s0 + $0x10] sm:$0xff]
    %v33 = vld [vmem:[%s0 + $0x18] sm:$0xff]
    %v34 = vld [vmem:[%s0 + $0x20] sm:$0xff]
    %v35 = vld [vmem:[%s0 + $0x28] sm:$0xff]
    %v36 = vld [vmem:[%s0 + $0x30] sm:$0xff]
    %v37 = vld [vmem:[%s0 + $0x38] sm:$0xff]
    %v38 = vld [vmem:[%s0 + $0x40] sm:$0xff]
    %v39 = vld [vmem:[%s0 + $0x48] sm:$0xff]
    %v40 = vld [vmem:[%s0 + $0x50] sm:$0xff]
    %v41 = vld [vmem:[%s0 + $0x58] sm:$0xff]
    %v42 = vld [vmem:[%s0 + $0x60] sm:$0xff]
    %v43 = vld [vmem:[%s0 + $0x68] sm:$0xff]
    %v44 = vld [vmem:[%s0 + $0x70] sm:$0xff]
    %v45 = vld [vmem:[%s0 + $0x78] sm:$0xff]
    %v46 = vpack.c.bf16 %v31, %v30
    %v47 = vpack.c.bf16 %v33, %v32
    %v48 = vpack.c.bf16 %v35, %v34
    %v49 = vpack.c.bf16 %v37, %v36
    %v50 = vpack.c.bf16 %v39, %v38
    %v51 = vpack.c.bf16 %v41, %v40
    %v52 = vpack.c.bf16 %v43, %v42
    %v53 = vpack.c.bf16 %v45, %v44
    %v54 = vld [vmem:[%s1] sm:$0xff]
    %v55 = vld [vmem:[%s1 + $0x8] sm:$0xff]
    %v56 = vld [vmem:[%s1 + $0x10] sm:$0xff]
    %v57 = vld [vmem:[%s1 + $0x18] sm:$0xff]
    %v58 = vpack.c.bf16 %v55, %v54
    %v59 = vpack.c.bf16 %v57, %v56
    %v60 = vld [vmem:[%s2] sm:$0x1]
    %v62 = vlaneseq
    %v63 = vshrl.u32 %v62, 7
    %v64 = vsub.s32 0, %v63
    %v65 = vrot.slane %v60, %v64
    %vm67 = vcmask 261120
    %v69 = vsel %vm67, %v46, 0
    %v72 = vsel %vm67, %v47, 0
    %v75 = vsel %vm67, %v48, 0
    %v78 = vsel %vm67, %v49, 0
    %v81 = vsel %vm67, %v50, 0
    %v84 = vsel %vm67, %v51, 0
    %v87 = vsel %vm67, %v52, 0
    %v90 = vsel %vm67, %v53, 0
    %92 = vmatprep.subr.bf16.mxu0 0
    %93 = vmatpush1.bf16.msra.mxu0 0
    %94 = vmatprep.subr.bf16.mxu0 0
    %95 = vmatpush1.bf16.msra.mxu0 0
    %96 = vmatprep.subr.bf16.mxu0 0
    %97 = vmatpush1.bf16.msra.mxu0 0
    %98 = vmatprep.subr.bf16.mxu0 0
    %99 = vmatpush1.bf16.msra.mxu0 0
    %100 = vmatprep.subr.bf16.mxu0 0
    %101 = vmatpush1.bf16.msra.mxu0 0
    %102 = vmatprep.subr.bf16.mxu0 0
    %103 = vmatpush1.bf16.msra.mxu0 0
    %104 = vmatprep.subr.bf16.mxu0 0
    %105 = vmatpush1.bf16.msra.mxu0 %v59
    %106 = vmatprep.subr.bf16.mxu0 0
    %107 = vmatpush1.bf16.msra.mxu0 %v58
    %108 = vmatprep.subr.bf16.mxu0 0
    %109 = vmatpush2.bf16.msra.mxu0 0
    %110 = vmatprep.subr.bf16.mxu0 0
    %111 = vmatpush2.bf16.msra.mxu0 0
    %112 = vmatprep.subr.bf16.mxu0 0
    %113 = vmatpush2.bf16.msra.mxu0 0
    %114 = vmatprep.subr.bf16.mxu0 0
    %115 = vmatpush2.bf16.msra.mxu0 0
    %116 = vmatprep.subr.bf16.mxu0 0
    %117 = vmatpush2.bf16.msra.mxu0 0
    %118 = vmatprep.subr.bf16.mxu0 0
    %119 = vmatpush2.bf16.msra.mxu0 0
    %120 = vmatprep.subr.bf16.mxu0 0
    %121 = vmatpush2.bf16.msra.mxu0 0
    %122 = vmatprep.subr.bf16.mxu0 0
    %123 = vmatpush2.bf16.msra.mxu0 0
    %124 = vmatprep.mubr.bf16.mxu0 0
    %125 = vmatmul.mubr.bf16.gmra.mxu0 %v69
    %v126 = vpop.f32.mrf.mxu0
    %v127 = vadd.f32 %v65, %v126
    %v128 = vpop.f32.mrf.mxu0
    %v129 = vpop.f32.mrf.mxu0
    %v130 = vadd.f32 %v65, %v129
    %v131 = vpop.f32.mrf.mxu0
    %132 = vmatprep.mubr.bf16.mxu0 0
    %133 = vmatmul.mubr.bf16.gmra.mxu0 %v72
    %v134 = vpop.f32.mrf.mxu0
    %v135 = vadd.f32 %v65, %v134
    %v136 = vpop.f32.mrf.mxu0
    %v137 = vpop.f32.mrf.mxu0
    %v138 = vadd.f32 %v65, %v137
    %v139 = vpop.f32.mrf.mxu0
    %140 = vmatprep.mubr.bf16.mxu0 0
    %141 = vmatmul.mubr.bf16.gmra.mxu0 %v75
    %v142 = vpop.f32.mrf.mxu0
    %v143 = vadd.f32 %v65, %v142
    %v144 = vpop.f32.mrf.mxu0
    %v145 = vpop.f32.mrf.mxu0
    %v146 = vadd.f32 %v65, %v145
    %v147 = vpop.f32.mrf.mxu0
    %148 = vmatprep.mubr.bf16.mxu0 0
    %149 = vmatmul.mubr.bf16.gmra.mxu0 %v78
    %v150 = vpop.f32.mrf.mxu0
    %v151 = vadd.f32 %v65, %v150
    %v152 = vpop.f32.mrf.mxu0
    %v153 = vpop.f32.mrf.mxu0
    %v154 = vadd.f32 %v65, %v153
    %v155 = vpop.f32.mrf.mxu0
    %156 = vmatprep.mubr.bf16.mxu0 0
    %157 = vmatmul.mubr.bf16.gmra.mxu0 %v81
    %v158 = vpop.f32.mrf.mxu0
    %v159 = vadd.f32 %v65, %v158
    %v160 = vpop.f32.mrf.mxu0
    %v161 = vpop.f32.mrf.mxu0
    %v162 = vadd.f32 %v65, %v161
    %v163 = vpop.f32.mrf.mxu0
    %164 = vmatprep.mubr.bf16.mxu0 0
    %165 = vmatmul.mubr.bf16.gmra.mxu0 %v84
    %v166 = vpop.f32.mrf.mxu0
    %v167 = vadd.f32 %v65, %v166
    %v168 = vpop.f32.mrf.mxu0
    %v169 = vpop.f32.mrf.mxu0
    %v170 = vadd.f32 %v65, %v169
    %v171 = vpop.f32.mrf.mxu0
    %172 = vmatprep.mubr.bf16.mxu0 0
    %173 = vmatmul.mubr.bf16.gmra.mxu0 %v87
    %v174 = vpop.f32.mrf.mxu0
    %v175 = vadd.f32 %v65, %v174
    %v176 = vpop.f32.mrf.mxu0
    %v177 = vpop.f32.mrf.mxu0
    %v178 = vadd.f32 %v65, %v177
    %v179 = vpop.f32.mrf.mxu0
    %180 = vmatprep.mubr.bf16.mxu0 0
    %181 = vmatmul.mubr.bf16.gmra.mxu0 %v90
    %v182 = vpop.f32.mrf.mxu0
    %v183 = vadd.f32 %v65, %v182
    %v184 = vpop.f32.mrf.mxu0
    %v185 = vpop.f32.mrf.mxu0
    %v186 = vadd.f32 %v65, %v185
    %v187 = vpop.f32.mrf.mxu0
    %188 = vdwg.mxu0
    %v189 = vmax.f32 %v127, 0.0
    %v190 = vmax.f32 %v130, 0.0
    %v191 = vmax.f32 %v135, 0.0
    %v192 = vmax.f32 %v138, 0.0
    %v193 = vmax.f32 %v143, 0.0
    %v194 = vmax.f32 %v146, 0.0
    %v195 = vmax.f32 %v151, 0.0
    %v196 = vmax.f32 %v154, 0.0
    %v197 = vmax.f32 %v159, 0.0
    %v198 = vmax.f32 %v162, 0.0
    %v199 = vmax.f32 %v167, 0.0
    %v200 = vmax.f32 %v170, 0.0
    %v201 = vmax.f32 %v175, 0.0
    %v202 = vmax.f32 %v178, 0.0
    %v203 = vmax.f32 %v183, 0.0
    %v204 = vmax.f32 %v186, 0.0
    %v205 = vpack.c.bf16 %v190, %v189
    %v206 = vpack.c.bf16 %v192, %v191
    %v207 = vpack.c.bf16 %v194, %v193
    %v208 = vpack.c.bf16 %v196, %v195
    %v209 = vpack.c.bf16 %v198, %v197
    %v210 = vpack.c.bf16 %v200, %v199
    %v211 = vpack.c.bf16 %v202, %v201
    %v212 = vpack.c.bf16 %v204, %v203
    %v213 = vld [vmem:[%s3] sm:$0xff]
    %v214 = vld [vmem:[%s3 + $0x8] sm:$0xff]
    %v215 = vld [vmem:[%s3 + $0x10] sm:$0xff]
    %v216 = vld [vmem:[%s3 + $0x18] sm:$0xff]
    %v217 = vpack.c.bf16 %v214, %v213
    %v218 = vpack.c.bf16 %v216, %v215
    %v219 = vld [vmem:[%s4] sm:$0x1]
    %v221 = vlaneseq
    %v222 = vshrl.u32 %v221, 7
    %v223 = vsub.s32 0, %v222
    %v224 = vrot.slane %v219, %v223
    %v227 = vsel %vm67, %v205, 0
    %v230 = vsel %vm67, %v206, 0
    %v233 = vsel %vm67, %v207, 0
    %v236 = vsel %vm67, %v208, 0
    %v239 = vsel %vm67, %v209, 0
    %v242 = vsel %vm67, %v210, 0
    %v245 = vsel %vm67, %v211, 0
    %v248 = vsel %vm67, %v212, 0
    %250 = vmatprep.subr.bf16.mxu0 0
    %251 = vmatpush1.bf16.msra.mxu0 0
    %252 = vmatprep.subr.bf16.mxu0 0
    %253 = vmatpush1.bf16.msra.mxu0 0
    %254 = vmatprep.subr.bf16.mxu0 0
    %255 = vmatpush1.bf16.msra.mxu0 0
    %256 = vmatprep.subr.bf16.mxu0 0
    %257 = vmatpush1.bf16.msra.mxu0 0
    %258 = vmatprep.subr.bf16.mxu0 0
    %259 = vmatpush1.bf16.msra.mxu0 0
    %260 = vmatprep.subr.bf16.mxu0 0
    %261 = vmatpush1.bf16.msra.mxu0 0
    %262 = vmatprep.subr.bf16.mxu0 0
    %263 = vmatpush1.bf16.msra.mxu0 %v218
    %264 = vmatprep.subr.bf16.mxu0 0
    %265 = vmatpush1.bf16.msra.mxu0 %v217
    %266 = vmatprep.subr.bf16.mxu0 0
    %267 = vmatpush2.bf16.msra.mxu0 0
    %268 = vmatprep.subr.bf16.mxu0 0
    %269 = vmatpush2.bf16.msra.mxu0 0
    %270 = vmatprep.subr.bf16.mxu0 0
    %271 = vmatpush2.bf16.msra.mxu0 0
    %272 = vmatprep.subr.bf16.mxu0 0
    %273 = vmatpush2.bf16.msra.mxu0 0
    %274 = vmatprep.subr.bf16.mxu0 0
    %275 = vmatpush2.bf16.msra.mxu0 0
    %276 = vmatprep.subr.bf16.mxu0 0
    %277 = vmatpush2.bf16.msra.mxu0 0
    %278 = vmatprep.subr.bf16.mxu0 0
    %279 = vmatpush2.bf16.msra.mxu0 0
    %280 = vmatprep.subr.bf16.mxu0 0
    %281 = vmatpush2.bf16.msra.mxu0 0
    %282 = vmatprep.mubr.bf16.mxu0 0
    %283 = vmatmul.mubr.bf16.gmra.mxu0 %v227
    %v284 = vpop.f32.mrf.mxu0
    %v285 = vadd.f32 %v224, %v284
    %v286 = vpop.f32.mrf.mxu0
    %v287 = vpop.f32.mrf.mxu0
    %v288 = vadd.f32 %v224, %v287
    %v289 = vpop.f32.mrf.mxu0
    %290 = vmatprep.mubr.bf16.mxu0 0
    %291 = vmatmul.mubr.bf16.gmra.mxu0 %v230
    %v292 = vpop.f32.mrf.mxu0
    %v293 = vadd.f32 %v224, %v292
    %v294 = vpop.f32.mrf.mxu0
    %v295 = vpop.f32.mrf.mxu0
    %v296 = vadd.f32 %v224, %v295
    %v297 = vpop.f32.mrf.mxu0
    %298 = vmatprep.mubr.bf16.mxu0 0
    %299 = vmatmul.mubr.bf16.gmra.mxu0 %v233
    %v300 = vpop.f32.mrf.mxu0
    %v301 = vadd.f32 %v224, %v300
    %v302 = vpop.f32.mrf.mxu0
    %v303 = vpop.f32.mrf.mxu0
    %v304 = vadd.f32 %v224, %v303
    %v305 = vpop.f32.mrf.mxu0
    %306 = vmatprep.mubr.bf16.mxu0 0
    %307 = vmatmul.mubr.bf16.gmra.mxu0 %v236
    %v308 = vpop.f32.mrf.mxu0
    %v309 = vadd.f32 %v224, %v308
    %v310 = vpop.f32.mrf.mxu0
    %v311 = vpop.f32.mrf.mxu0
    %v312 = vadd.f32 %v224, %v311
    %v313 = vpop.f32.mrf.mxu0
    %314 = vmatprep.mubr.bf16.mxu0 0
    %315 = vmatmul.mubr.bf16.gmra.mxu0 %v239
    %v316 = vpop.f32.mrf.mxu0
    %v317 = vadd.f32 %v224, %v316
    %v318 = vpop.f32.mrf.mxu0
    %v319 = vpop.f32.mrf.mxu0
    %v320 = vadd.f32 %v224, %v319
    %v321 = vpop.f32.mrf.mxu0
    %322 = vmatprep.mubr.bf16.mxu0 0
    %323 = vmatmul.mubr.bf16.gmra.mxu0 %v242
    %v324 = vpop.f32.mrf.mxu0
    %v325 = vadd.f32 %v224, %v324
    %v326 = vpop.f32.mrf.mxu0
    %v327 = vpop.f32.mrf.mxu0
    %v328 = vadd.f32 %v224, %v327
    %v329 = vpop.f32.mrf.mxu0
    %330 = vmatprep.mubr.bf16.mxu0 0
    %331 = vmatmul.mubr.bf16.gmra.mxu0 %v245
    %v332 = vpop.f32.mrf.mxu0
    %v333 = vadd.f32 %v224, %v332
    %v334 = vpop.f32.mrf.mxu0
    %v335 = vpop.f32.mrf.mxu0
    %v336 = vadd.f32 %v224, %v335
    %v337 = vpop.f32.mrf.mxu0
    %338 = vmatprep.mubr.bf16.mxu0 0
    %339 = vmatmul.mubr.bf16.gmra.mxu0 %v248
    %v340 = vpop.f32.mrf.mxu0
    %v341 = vadd.f32 %v224, %v340
    %v342 = vpop.f32.mrf.mxu0
    %v343 = vpop.f32.mrf.mxu0
    %v344 = vadd.f32 %v224, %v343
    %v345 = vpop.f32.mrf.mxu0
    %346 = vdwg.mxu0
    %v347 = vmax.f32 %v285, 0.0
    %v348 = vmax.f32 %v288, 0.0
    %v349 = vmax.f32 %v293, 0.0
    %v350 = vmax.f32 %v296, 0.0
    %v351 = vmax.f32 %v301, 0.0
    %v352 = vmax.f32 %v304, 0.0
    %v353 = vmax.f32 %v309, 0.0
    %v354 = vmax.f32 %v312, 0.0
    %v355 = vmax.f32 %v317, 0.0
    %v356 = vmax.f32 %v320, 0.0
    %v357 = vmax.f32 %v325, 0.0
    %v358 = vmax.f32 %v328, 0.0
    %v359 = vmax.f32 %v333, 0.0
    %v360 = vmax.f32 %v336, 0.0
    %v361 = vmax.f32 %v341, 0.0
    %v362 = vmax.f32 %v344, 0.0
    %v363 = vpack.c.bf16 %v348, %v347
    %v364 = vpack.c.bf16 %v350, %v349
    %v365 = vpack.c.bf16 %v352, %v351
    %v366 = vpack.c.bf16 %v354, %v353
    %v367 = vpack.c.bf16 %v356, %v355
    %v368 = vpack.c.bf16 %v358, %v357
    %v369 = vpack.c.bf16 %v360, %v359
    %v370 = vpack.c.bf16 %v362, %v361
    %v371 = vld [vmem:[%s5] sm:$0x1]
    %v372 = vpack.c.bf16 %v371, %v371
    %v373 = vld [vmem:[#allocation2] sm:$0x1]
    %375 = vset.pattern.permute.xlu0 0
    %376 = vperm.xlu0 %375, %v373
    %v377 = vpop.permute.xlu0 %376
    %v379 = vlaneseq
    %v380 = vshrl.u32 %v379, 7
    %v381 = vsub.s32 0, %v380
    %v382 = vrot.slane %v377, %v381
    %v384 = vsel %vm67, %v372, 0
    %v387 = vsel %vm67, %v363, 0
    %v390 = vsel %vm67, %v364, 0
    %v393 = vsel %vm67, %v365, 0
    %v396 = vsel %vm67, %v366, 0
    %v399 = vsel %vm67, %v367, 0
    %v402 = vsel %vm67, %v368, 0
    %v405 = vsel %vm67, %v369, 0
    %v408 = vsel %vm67, %v370, 0
    %410 = vmatprep.subr.bf16.mxu0 0
    %411 = vmatpush1.bf16.xpose.msra.mxu0 %v408
    %412 = vmatprep.subr.bf16.mxu0 0
    %413 = vmatpush1.bf16.xpose.msra.mxu0 %v405
    %414 = vmatprep.subr.bf16.mxu0 0
    %415 = vmatpush1.bf16.xpose.msra.mxu0 %v402
    %416 = vmatprep.subr.bf16.mxu0 0
    %417 = vmatpush1.bf16.xpose.msra.mxu0 %v399
    %418 = vmatprep.subr.bf16.mxu0 0
    %419 = vmatpush1.bf16.xpose.msra.mxu0 %v396
    %420 = vmatprep.subr.bf16.mxu0 0
    %421 = vmatpush1.bf16.xpose.msra.mxu0 %v393
    %422 = vmatprep.subr.bf16.mxu0 0
    %423 = vmatpush1.bf16.xpose.msra.mxu0 %v390
    %424 = vmatprep.subr.bf16.mxu0 0
    %425 = vmatpush1.bf16.xpose.msra.mxu0 %v387
    %426 = vmatprep.subr.bf16.mxu0 0
    %427 = vmatpush2.bf16.xpose.msra.mxu0 0
    %428 = vmatprep.subr.bf16.mxu0 0
    %429 = vmatpush2.bf16.xpose.msra.mxu0 0
    %430 = vmatprep.subr.bf16.mxu0 0
    %431 = vmatpush2.bf16.xpose.msra.mxu0 0
    %432 = vmatprep.subr.bf16.mxu0 0
    %433 = vmatpush2.bf16.xpose.msra.mxu0 0
    %434 = vmatprep.subr.bf16.mxu0 0
    %435 = vmatpush2.bf16.xpose.msra.mxu0 0
    %436 = vmatprep.subr.bf16.mxu0 0
    %437 = vmatpush2.bf16.xpose.msra.mxu0 0
    %438 = vmatprep.subr.bf16.mxu0 0
    %439 = vmatpush2.bf16.xpose.msra.mxu0 0
    %440 = vmatprep.subr.bf16.mxu0 0
    %441 = vmatpush2.bf16.xpose.msra.mxu0 0
    %442 = vmatprep.mubr.bf16.mxu0 0
    %443 = vmatmul.mubr.bf16.gmra.mxu0 %v384
    %v444 = vpop.f32.mrf.mxu0
    %v445 = vadd.f32 %v382, %v444
    %v446 = vpop.f32.mrf.mxu0
    %v447 = vpop.f32.mrf.mxu0
    %v448 = vpop.f32.mrf.mxu0
    %449 = vdwg.mxu0
    %450 = vst [vmem:[#allocation3] sm:$0x1] %v445
    // Predicated region
    $region30: #{tpu_custom_call.1} parent=1 // pred_check
      _
    $region31: #{tpu_custom_call.1} parent=1 // pred_check_branch
      %452 = sbr.rel (0) target = $region33
    $region32: #{tpu_custom_call.1} parent=1 // pred_region
      %s454 = ssub.s32 16, 16
      %455 = vsyncadd [#allocation4], %s454
      %s457 = sshll.u32 [#allocation3], 4
      %s458 = int_to_ptr.vmem [resolvable:$true] %s457
      %460 = dma.vmem_to_hbm [thread:$0]  %s458, 16, %s7, [#allocation4]
    $region33: #{tpu_custom_call.1} parent=1 // pred_fallthru
      _
    // Predicated region
    $region34: #{tpu_custom_call.1} parent=1 // pred_check
      _
    $region35: #{tpu_custom_call.1} parent=1 // pred_check_branch
      %462 = sbr.rel (0) target = $region37
    $region36: #{tpu_custom_call.1} parent=1 // pred_region
      %463 = dma.done [#allocation4], 16
    $region37: #{tpu_custom_call.1} parent=1 // pred_fallthru
      _
    %464 = vsyncpa [#allocation4], 1

</llo_original>
